<compile_context>
chip_gen: v5e
topology: v5e:2x2
jax: 0.10.0
libtpu: 0.0.40
codegen_flags: <defaults>
</compile_context>

<pallas_src>
from math import floor, ceil
from functools import partial

import jax
import jax.numpy as jnp
import numpy as np
from jax.experimental import pallas as pl
from jax.experimental.pallas import tpu as pltpu


# --------------------------------------------------------------------------- #
# Static geometry
# --------------------------------------------------------------------------- #
def _level_params(H, W, num_level):
    """Static per-level pooling geometry (matches torch F.max/avg_pool2d)."""
    params = []
    for i in range(num_level):
        level = i + 1
        kh, kw = ceil(H / level), ceil(W / level)
        sh, sw = kh, kw
        ph = floor((kh * level - H + 1) / 2)
        pw = floor((kw * level - W + 1) / 2)
        Lh = (H + 2 * ph - kh) // sh + 1
        Lw = (W + 2 * pw - kw) // sw + 1
        # every window must overlap the valid region (torch requirement)
        for oh in range(Lh):
            r0, r1 = max(0, oh * sh - ph), min(H, oh * sh - ph + kh)
            assert r1 > r0, "pooling window entirely inside padding"
        for ow in range(Lw):
            c0, c1 = max(0, ow * sw - pw), min(W, ow * sw - pw + kw)
            assert c1 > c0, "pooling window entirely inside padding"
        params.append((kh, kw, ph, pw, Lh, Lw))
    return params


def _build_pool_matrix(H, W, levels):
    """(H*W, G) avg-pool weight matrix: columns are flattened (level, oh, ow)
    bins with weight 1/(kh*kw) over each CLIPPED window (== zero padding with
    count_include_pad=True, torch's default)."""
    G = sum(Lh * Lw for (_, _, _, _, Lh, Lw) in levels)
    P = np.zeros((H * W, G), dtype=np.float32)
    col = 0
    for (kh, kw, ph, pw, Lh, Lw) in levels:
        inv = 1.0 / float(kh * kw)
        for oh in range(Lh):
            r0, r1 = max(0, oh * kh - ph), min(H, oh * kh - ph + kh)
            for ow in range(Lw):
                c0, c1 = max(0, ow * kw - pw), min(W, ow * kw - pw + kw)
                for r in range(r0, r1):
                    P[r * W + c0: r * W + c1, col] = inv
                col += 1
    return P


def _round_up(x, m):
    return -(-x // m) * m


def _pick_block_m(NC, HW, itemsize):
    """Row block for the avg_pool matmul: fill a VMEM budget, but keep >= 2
    grid steps once NC >= 256 (v7x megacore sharding + DMA/compute overlap)."""
    if NC < 256:
        return NC
    budget = 16 * 1024 * 1024
    per_row = HW * (2 * itemsize + 4)            # 2x input buffers + f32 work
    cap = max(128, min(4096, (budget // per_row) // 128 * 128))
    cap = min(cap, _round_up(-(-NC // 2), 128))  # guarantee >= 2 grid steps
    return max(8, (min(cap, NC) // 8) * 8)


def _pick_block_nc(NC, H, W, itemsize):
    """Channel block for the max_pool channels-last kernel (same constraints)."""
    if NC < 256:
        return NC
    budget = 16 * 1024 * 1024
    per_chan = H * W * 2 * itemsize + 128        # 2x input buffers (+ tiny out)
    cap = max(128, min(2048, (budget // per_chan) // 128 * 128))
    cap = min(cap, _round_up(-(-NC // 2), 128))
    return cap


# --------------------------------------------------------------------------- #
# Kernels
# --------------------------------------------------------------------------- #
def _avg_spp_matmul_kernel(x_ref, p_ref, o_ref):
    # x_ref: (block_m, H*W) rows of the free NCHW view; p_ref: (H*W, G).
    # One MXU matmul produces every pyramid bin for this row block.
    acc = jnp.dot(x_ref[...].astype(jnp.float32), p_ref[...],
                  preferred_element_type=jnp.float32,
                  precision=jax.lax.Precision.HIGHEST)
    o_ref[...] = acc.astype(o_ref.dtype)


def _make_max_spp_kernel(H, W, levels):
    """max_pool: channels-last (H, W, bnc) tile, clipped windows, native-dtype
    maxes (exact), direct per-bin stores into a single (G, bnc) output."""

    def kernel(x_ref, o_ref):
        # TODO(synk): for H, W >= 32 switch the unrolled row loops to
        # lax.fori_loop(..., unroll=True) to bound vreg live ranges.
        row = 0
        for (kh, kw, ph, pw, Lh, Lw) in levels:
            for oh in range(Lh):
                r0 = max(0, oh * kh - ph)
                r1 = min(H, oh * kh - ph + kh)
                acc = x_ref[r0]                            # (W, bnc) VMEM load
                for r in range(r0 + 1, r1):
                    acc = jnp.maximum(acc, x_ref[r])       # elementwise VPU
                for ow in range(Lw):
                    c0 = max(0, ow * kw - pw)
                    c1 = min(W, ow * kw - pw + kw)
                    o_ref[row:row + 1, :] = jnp.max(
                        acc[c0:c1, :], axis=0, keepdims=True
                    ).astype(o_ref.dtype)                  # lane-dense store
                    row += 1

    return kernel


# --------------------------------------------------------------------------- #
# Wrapper
# --------------------------------------------------------------------------- #
@partial(jax.jit, static_argnames=('num_level', 'pool_type'))
def spatial_pyramid_pooling_2d(x, num_level, pool_type='max_pool'):
    """JAX/Pallas equivalent of SpatialPyramidPooling2d.forward (x is NCHW)."""
    N, C, H, W = x.shape
    NC, HW = N * C, H * W
    levels = _level_params(H, W, num_level)
    G = sum(Lh * Lw for (_, _, _, _, Lh, Lw) in levels)

    if pool_type != 'max_pool':
        # ---- avg_pool: pooling-matrix matmul on the MXU (no HBM transpose) --
        x2d = x.reshape(NC, HW)                    # free view of NCHW
        P = jnp.asarray(_build_pool_matrix(H, W, levels), dtype=jnp.float32)
        block_m = _pick_block_m(NC, HW, x.dtype.itemsize)
        grid = (pl.cdiv(NC, block_m),)

        pooled = pl.pallas_call(
            _avg_spp_matmul_kernel,
            out_shape=jax.ShapeDtypeStruct((NC, G), x.dtype),
            grid=grid,
            in_specs=[pl.BlockSpec((block_m, HW), lambda g: (g, 0)),
                      pl.BlockSpec((HW, G), lambda g: (0, 0))],
            out_specs=pl.BlockSpec((block_m, G), lambda g: (g, 0)),
            compiler_params=pltpu.CompilerParams(
                dimension_semantics=("parallel",),
                vmem_limit_bytes=32 * 1024 * 1024),
            cost_estimate=pl.CostEstimate(
                flops=2 * NC * HW * G,
                transcendentals=0,
                bytes_accessed=(NC * HW + HW * G + NC * G) * x.dtype.itemsize),
        )(x2d, P)

        # rows of `pooled` are (n, c)-major, columns are (level, oh, ow);
        # slicing per level + reshape reproduces torch's per-level .view(N,-1)
        # then cat — tiny tensor, cheap XLA plumbing.
        flat, off = [], 0
        for (_, _, _, _, Lh, Lw) in levels:
            flat.append(pooled[:, off:off + Lh * Lw].reshape(N, C * Lh * Lw))
            off += Lh * Lw
        return jnp.concatenate(flat, axis=1)

    # ---- max_pool: channels-last lanes, clipped-window elementwise maxes ----
    x_cl = jnp.transpose(x, (2, 3, 0, 1)).reshape(H, W, NC)
    block_nc = _pick_block_nc(NC, H, W, x.dtype.itemsize)
    grid = (pl.cdiv(NC, block_nc),)

    pooled = pl.pallas_call(
        _make_max_spp_kernel(H, W, levels),
        out_shape=jax.ShapeDtypeStruct((G, NC), x.dtype),
        grid=grid,
        in_specs=[pl.BlockSpec((H, W, block_nc), lambda g: (0, 0, g))],
        out_specs=pl.BlockSpec((G, block_nc), lambda g: (0, g)),
        compiler_params=pltpu.CompilerParams(
            dimension_semantics=("parallel",),
            allow_input_fusion=[0],          # fuse the transpose into the call
            vmem_limit_bytes=32 * 1024 * 1024),
        cost_estimate=pl.CostEstimate(
            flops=NC * HW * num_level,
            transcendentals=0,
            bytes_accessed=(x.size + G * NC) * x.dtype.itemsize),
    )(x_cl)

    flat, off = [], 0
    for (_, _, _, _, Lh, Lw) in levels:
        t = pooled[off:off + Lh * Lw, :].reshape(Lh * Lw, N, C)
        flat.append(t.transpose(1, 2, 0).reshape(N, C * Lh * Lw))
        off += Lh * Lw
    return jnp.concatenate(flat, axis=1)


# --------------------------------------------------------------------------- #
# Reference + test
# --------------------------------------------------------------------------- #
def _reference_spp(x, num_level, pool_type='max_pool'):
    """Pure-numpy reference mirroring F.max_pool2d / F.avg_pool2d semantics."""
    x = np.asarray(x)
    N, C, H, W = x.shape
    outs = []
    for i in range(num_level):
        level = i + 1
        kh, kw = ceil(H / level), ceil(W / level)
        sh, sw = kh, kw
        ph = floor((kh * level - H + 1) / 2)
        pw = floor((kw * level - W + 1) / 2)
        pad_val = -np.inf if pool_type == 'max_pool' else 0.0
        xp = np.pad(x, ((0, 0), (0, 0), (ph, ph), (pw, pw)),
                    constant_values=pad_val)
        Hp, Wp = H + 2 * ph, W + 2 * pw
        Lh = (Hp - kh) // sh + 1
        Lw = (Wp - kw) // sw + 1
        out = np.empty((N, C, Lh, Lw), dtype=x.dtype)
        for oh in range(Lh):
            for ow in range(Lw):
                win = xp[:, :, oh * sh:oh * sh + kh, ow * sw:ow * sw + kw]
                if pool_type == 'max_pool':
                    out[:, :, oh, ow] = win.max(axis=(2, 3))
                else:
                    out[:, :, oh, ow] = win.sum(axis=(2, 3)) / (kh * kw)
        outs.append(out.reshape(N, -1))
    return np.concatenate(outs, axis=1)


if __name__ == "__main__":
    key = jax.random.PRNGKey(0)
    N, C, H, W = 2, 4, 16, 16
    num_level = 3
    x = jax.random.normal(key, (N, C, H, W), dtype=jnp.float32)

    # MyNet instantiates SPP with pool_type='avg_pool'; check max_pool too.
    for pool_type in ('avg_pool', 'max_pool'):
        out = spatial_pyramid_pooling_2d(x, num_level, pool_type=pool_type)
        out = jax.block_until_ready(out)
        ref = _reference_spp(np.asarray(x), num_level, pool_type=pool_type)
        assert out.shape == ref.shape, (out.shape, ref.shape)
        np.testing.assert_allclose(np.asarray(out), ref, rtol=1e-5, atol=1e-5)

    print("KERNEL_OK")
</pallas_src>

<mosaic_0001>
module attributes {stable_mosaic.version = 11 : i64} {
  func.func @_avg_spp_matmul_kernel(%arg0: i32, %arg1: memref<8x256xf32, #tpu.memory_space<vmem>>, %arg2: memref<256x14xf32, #tpu.memory_space<vmem>>, %arg3: memref<8x14xf32, #tpu.memory_space<vmem>>) attributes {dimension_semantics = [#tpu.dimension_semantics<parallel>], iteration_bounds = array<i64: 1>, scalar_prefetch = 0 : i64, scratch_operands = 0 : i64, tpu.core_type = #tpu.core_type<tc>, window_params = [{transform_indices = @transform_0, window_bounds = array<i64: 8, 256>}, {pipeline_mode = #tpu.pipeline_mode<synchronous>, transform_indices = @transform_1, window_bounds = array<i64: 256, 14>}, {transform_indices = @transform_2, window_bounds = array<i64: 8, 14>}]} {
    %c0 = arith.constant 0 : index
    %c0_0 = arith.constant 0 : index
    %0 = vector.load %arg1[%c0, %c0_0] : memref<8x256xf32, #tpu.memory_space<vmem>>, vector<8x256xf32>
    %c0_1 = arith.constant 0 : index
    %c0_2 = arith.constant 0 : index
    %1 = vector.load %arg2[%c0_1, %c0_2] : memref<256x14xf32, #tpu.memory_space<vmem>>, vector<256x14xf32>
    %cst = arith.constant dense<0.000000e+00> : vector<8x14xf32>
    %2 = tpu.matmul %0, %1, %cst {dimension_numbers = #tpu.dot_dimension_numbers<[1], [0], [0], [1], [0, 0, 1, 1], [], []>, precision = #tpu.contract_precision<fp32>} : vector<8x256xf32>, vector<256x14xf32>, vector<8x14xf32> -> vector<8x14xf32>
    %c0_3 = arith.constant 0 : index
    %c0_4 = arith.constant 0 : index
    %3 = vector.load %arg3[%c0_3, %c0_4] : memref<8x14xf32, #tpu.memory_space<vmem>>, vector<8x14xf32>
    tpu.vector_store %arg3[%c0_3, %c0_4], %2 {strides = array<i32>} : memref<8x14xf32, #tpu.memory_space<vmem>>, vector<8x14xf32>,
    return
  }
  func.func @transform_0(%arg0: i32) -> (i32, i32) {
    %c0_i32 = arith.constant 0 : i32
    %c0_i32_0 = arith.constant 0 : i32
    return %arg0, %c0_i32 : i32, i32
  }
  func.func @transform_1(%arg0: i32) -> (i32, i32) {
    %c0_i32 = arith.constant 0 : i32
    %c0_i32_0 = arith.constant 0 : i32
    %c0_i32_1 = arith.constant 0 : i32
    return %c0_i32, %c0_i32_0 : i32, i32
  }
  func.func @transform_2(%arg0: i32) -> (i32, i32) {
    %c0_i32 = arith.constant 0 : i32
    %c0_i32_0 = arith.constant 0 : i32
    return %arg0, %c0_i32 : i32, i32
  }
}

</mosaic_0001>

<llo_original>
// kernel: spatial_pyramid_pooling_2d.1
$region0: #{spatial_pyramid_pooling_2d.1}
  #allocation0 [shape = 'u32[]', space=smem, size = 0x4, offset = 0x4, fixed_abs, tag = 'smem constant byte address 0x4 - core index']
  #allocation1 [shape = 'u32[72,128]{1,0:T(1,128)}', space=vmem, size = 0x9000, scoped, tag = 'internal scratch']
  %s0 = inlined_call_operand.vmem [shape: f32[8,256], index: 0, kind: input, shape index: {}]
  %s1 = inlined_call_operand.hbm [shape: f32[256,14], index: 1, kind: input, shape index: {}]
  %s2 = inlined_call_operand.vmem [shape: f32[8,14], index: 2, kind: output, shape index: {}]
  %s3 = sld [smem:[#allocation0]]
  $region22: #{spatial_pyramid_pooling_2d.1} parent=0
    _
  %s5 = ssub.s32 1, %s3
  %s6 = scalar_select 0, %s5, %s3
  $region1: #{spatial_pyramid_pooling_2d.1} parent=0
    #allocation2 [shape = 'u8[131072]{0}', space=vmem, size = 0x20000, scoped, tag = 'input window, operand 1, single buffered']
    #allocation3 [shape = 's32[1]{0}', space=sflag, size = 0x4, scoped, tag = 'scoped memory for spatial_pyramid_pooling_2d.1']
    %7 = vsyncpa [#allocation3], 0
    // Predicated region
    $region2: #{spatial_pyramid_pooling_2d.1} parent=1 // pred_check
      _
    $region3: #{spatial_pyramid_pooling_2d.1} parent=1 // pred_check_branch
      %9 = sbr.rel (0) target = $region5
    $region4: #{spatial_pyramid_pooling_2d.1} parent=1 // pred_region
      _
    $region5: #{spatial_pyramid_pooling_2d.1} parent=1 // pred_fallthru
      _
    // Predicated region
    $region6: #{spatial_pyramid_pooling_2d.1} parent=1 // pred_check
      _
    $region7: #{spatial_pyramid_pooling_2d.1} parent=1 // pred_check_branch
      %11 = sbr.rel (0) target = $region9
    $region8: #{spatial_pyramid_pooling_2d.1} parent=1 // pred_region
      %13 = vsyncadd [#allocation3], 0
      %s14 = sshll.u32 %s1, 4
      %s15 = int_to_ptr.hbm [resolvable:$true] %s14
      %s16 = sshll.u32 [#allocation2], 4
      %s17 = int_to_ptr.vmem [resolvable:$true] %s16
      %22 = dma.hbm_to_vmem [thread:$0]  %s15, 4096, %s17, [#allocation3], 128, 128, 8
    $region9: #{spatial_pyramid_pooling_2d.1} parent=1 // pred_fallthru
      _
    // Predicated region
    $region10: #{spatial_pyramid_pooling_2d.1} parent=1 // pred_check
      _
    $region11: #{spatial_pyramid_pooling_2d.1} parent=1 // pred_check_branch
      %24 = sbr.rel (0) target = $region13
    $region12: #{spatial_pyramid_pooling_2d.1} parent=1 // pred_region
      %26 = dma.done [#allocation3], 4096
    $region13: #{spatial_pyramid_pooling_2d.1} parent=1 // pred_fallthru
      _
    %v27 = vld [vmem:[%s0] sm:$0xff]
    %v28 = vld [vmem:[%s0 + $0x8] sm:$0xff]
    %v29 = vld [vmem:[#allocation2] sm:$0xff]
    %v30 = vld [vmem:[#allocation2 + $0x8] sm:$0xff]
    %v31 = vld [vmem:[#allocation2 + $0x10] sm:$0xff]
    %v32 = vld [vmem:[#allocation2 + $0x18] sm:$0xff]
    %v33 = vld [vmem:[#allocation2 + $0x20] sm:$0xff]
    %v34 = vld [vmem:[#allocation2 + $0x28] sm:$0xff]
    %v35 = vld [vmem:[#allocation2 + $0x30] sm:$0xff]
    %v36 = vld [vmem:[#allocation2 + $0x38] sm:$0xff]
    %v37 = vld [vmem:[#allocation2 + $0x40] sm:$0xff]
    %v38 = vld [vmem:[#allocation2 + $0x48] sm:$0xff]
    %v39 = vld [vmem:[#allocation2 + $0x50] sm:$0xff]
    %v40 = vld [vmem:[#allocation2 + $0x58] sm:$0xff]
    %v41 = vld [vmem:[#allocation2 + $0x60] sm:$0xff]
    %v42 = vld [vmem:[#allocation2 + $0x68] sm:$0xff]
    %v43 = vld [vmem:[#allocation2 + $0x70] sm:$0xff]
    %v44 = vld [vmem:[#allocation2 + $0x78] sm:$0xff]
    %v45 = vld [vmem:[#allocation2 + $0x80] sm:$0xff]
    %v46 = vld [vmem:[#allocation2 + $0x88] sm:$0xff]
    %v47 = vld [vmem:[#allocation2 + $0x90] sm:$0xff]
    %v48 = vld [vmem:[#allocation2 + $0x98] sm:$0xff]
    %v49 = vld [vmem:[#allocation2 + $0xa0] sm:$0xff]
    %v50 = vld [vmem:[#allocation2 + $0xa8] sm:$0xff]
    %v51 = vld [vmem:[#allocation2 + $0xb0] sm:$0xff]
    %v52 = vld [vmem:[#allocation2 + $0xb8] sm:$0xff]
    %v53 = vld [vmem:[#allocation2 + $0xc0] sm:$0xff]
    %v54 = vld [vmem:[#allocation2 + $0xc8] sm:$0xff]
    %v55 = vld [vmem:[#allocation2 + $0xd0] sm:$0xff]
    %v56 = vld [vmem:[#allocation2 + $0xd8] sm:$0xff]
    %v57 = vld [vmem:[#allocation2 + $0xe0] sm:$0xff]
    %v58 = vld [vmem:[#allocation2 + $0xe8] sm:$0xff]
    %v59 = vld [vmem:[#allocation2 + $0xf0] sm:$0xff]
    %v60 = vld [vmem:[#allocation2 + $0xf8] sm:$0xff]
    %v61 = vand.u32 %v44, 4294901760
    %62 = vmatpush.msra.mxu0 %v61
    %v63 = vand.u32 %v43, 4294901760
    %64 = vmatpush.msra.mxu0 %v63
    %v65 = vand.u32 %v42, 4294901760
    %66 = vmatpush.msra.mxu0 %v65
    %v67 = vand.u32 %v41, 4294901760
    %68 = vmatpush.msra.mxu0 %v67
    %v69 = vand.u32 %v40, 4294901760
    %70 = vmatpush.msra.mxu0 %v69
    %v71 = vand.u32 %v39, 4294901760
    %72 = vmatpush.msra.mxu0 %v71
    %v73 = vand.u32 %v38, 4294901760
    %74 = vmatpush.msra.mxu0 %v73
    %v75 = vand.u32 %v37, 4294901760
    %76 = vmatpush.msra.mxu0 %v75
    %v77 = vand.u32 %v36, 4294901760
    %78 = vmatpush.msra.mxu0 %v77
    %v79 = vand.u32 %v35, 4294901760
    %80 = vmatpush.msra.mxu0 %v79
    %v81 = vand.u32 %v34, 4294901760
    %82 = vmatpush.msra.mxu0 %v81
    %v83 = vand.u32 %v33, 4294901760
    %84 = vmatpush.msra.mxu0 %v83
    %v85 = vand.u32 %v32, 4294901760
    %86 = vmatpush.msra.mxu0 %v85
    %v87 = vand.u32 %v31, 4294901760
    %88 = vmatpush.msra.mxu0 %v87
    %v89 = vand.u32 %v30, 4294901760
    %90 = vmatpush.msra.mxu0 %v89
    %v91 = vand.u32 %v29, 4294901760
    %92 = vmatpush.msra.mxu0 %v91
    %v93 = vand.u32 %v27, 4294901760
    %v94 = vsub.f32 %v27, %v93
    %v95 = vand.u32 %v94, 4294901760
    %v96 = vsub.f32 %v94, %v95
    %v97 = vand.u32 %v96, 4294901760
    %98 = vmatmul.f32.gmra.mxu0 %v97
    %v99 = vpop.f32.mrf.mxu0
    %v100 = vadd.f32 0.0, %v99
    %101 = vdwg.mxu0
    %v102 = vand.u32 %v44, 4294901760
    %v103 = vsub.f32 %v44, %v102
    %v104 = vand.u32 %v103, 4294901760
    %v105 = vsub.f32 %v103, %v104
    %v106 = vand.u32 %v105, 4294901760
    %107 = vmatpush.msra.mxu0 %v106
    %v108 = vand.u32 %v43, 4294901760
    %v109 = vsub.f32 %v43, %v108
    %v110 = vand.u32 %v109, 4294901760
    %v111 = vsub.f32 %v109, %v110
    %v112 = vand.u32 %v111, 4294901760
    %113 = vmatpush.msra.mxu0 %v112
    %v114 = vand.u32 %v42, 4294901760
    %v115 = vsub.f32 %v42, %v114
    %v116 = vand.u32 %v115, 4294901760
    %v117 = vsub.f32 %v115, %v116
    %v118 = vand.u32 %v117, 4294901760
    %119 = vmatpush.msra.mxu0 %v118
    %v120 = vand.u32 %v41, 4294901760
    %v121 = vsub.f32 %v41, %v120
    %v122 = vand.u32 %v121, 4294901760
    %v123 = vsub.f32 %v121, %v122
    %v124 = vand.u32 %v123, 4294901760
    %125 = vmatpush.msra.mxu0 %v124
    %v126 = vand.u32 %v40, 4294901760
    %v127 = vsub.f32 %v40, %v126
    %v128 = vand.u32 %v127, 4294901760
    %v129 = vsub.f32 %v127, %v128
    %v130 = vand.u32 %v129, 4294901760
    %131 = vmatpush.msra.mxu0 %v130
    %v132 = vand.u32 %v39, 4294901760
    %v133 = vsub.f32 %v39, %v132
    %v134 = vand.u32 %v133, 4294901760
    %v135 = vsub.f32 %v133, %v134
    %v136 = vand.u32 %v135, 4294901760
    %137 = vmatpush.msra.mxu0 %v136
    %v138 = vand.u32 %v38, 4294901760
    %v139 = vsub.f32 %v38, %v138
    %v140 = vand.u32 %v139, 4294901760
    %v141 = vsub.f32 %v139, %v140
    %v142 = vand.u32 %v141, 4294901760
    %143 = vmatpush.msra.mxu0 %v142
    %v144 = vand.u32 %v37, 4294901760
    %v145 = vsub.f32 %v37, %v144
    %v146 = vand.u32 %v145, 4294901760
    %v147 = vsub.f32 %v145, %v146
    %v148 = vand.u32 %v147, 4294901760
    %149 = vmatpush.msra.mxu0 %v148
    %v150 = vand.u32 %v36, 4294901760
    %v151 = vsub.f32 %v36, %v150
    %v152 = vand.u32 %v151, 4294901760
    %v153 = vsub.f32 %v151, %v152
    %v154 = vand.u32 %v153, 4294901760
    %155 = vmatpush.msra.mxu0 %v154
    %v156 = vand.u32 %v35, 4294901760
    %v157 = vsub.f32 %v35, %v156
    %v158 = vand.u32 %v157, 4294901760
    %v159 = vsub.f32 %v157, %v158
    %v160 = vand.u32 %v159, 4294901760
    %161 = vmatpush.msra.mxu0 %v160
    %v162 = vand.u32 %v34, 4294901760
    %v163 = vsub.f32 %v34, %v162
    %v164 = vand.u32 %v163, 4294901760
    %v165 = vsub.f32 %v163, %v164
    %v166 = vand.u32 %v165, 4294901760
    %167 = vmatpush.msra.mxu0 %v166
    %v168 = vand.u32 %v33, 4294901760
    %v169 = vsub.f32 %v33, %v168
    %v170 = vand.u32 %v169, 4294901760
    %v171 = vsub.f32 %v169, %v170
    %v172 = vand.u32 %v171, 4294901760
    %173 = vmatpush.msra.mxu0 %v172
    %v174 = vand.u32 %v32, 4294901760
    %v175 = vsub.f32 %v32, %v174
    %v176 = vand.u32 %v175, 4294901760
    %v177 = vsub.f32 %v175, %v176
    %v178 = vand.u32 %v177, 4294901760
    %179 = vmatpush.msra.mxu0 %v178
    %v180 = vand.u32 %v31, 4294901760
    %v181 = vsub.f32 %v31, %v180
    %v182 = vand.u32 %v181, 4294901760
    %v183 = vsub.f32 %v181, %v182
    %v184 = vand.u32 %v183, 4294901760
    %185 = vmatpush.msra.mxu0 %v184
    %v186 = vand.u32 %v30, 4294901760
    %v187 = vsub.f32 %v30, %v186
    %v188 = vand.u32 %v187, 4294901760
    %v189 = vsub.f32 %v187, %v188
    %v190 = vand.u32 %v189, 4294901760
    %191 = vmatpush.msra.mxu0 %v190
    %v192 = vand.u32 %v29, 4294901760
    %v193 = vsub.f32 %v29, %v192
    %v194 = vand.u32 %v193, 4294901760
    %v195 = vsub.f32 %v193, %v194
    %v196 = vand.u32 %v195, 4294901760
    %197 = vmatpush.msra.mxu0 %v196
    %v198 = vand.u32 %v27, 4294901760
    %199 = vmatmul.f32.gmra.mxu0 %v198
    %v200 = vpop.f32.mrf.mxu0
    %v201 = vadd.f32 %v100, %v200
    %202 = vdwg.mxu0
    %v203 = vand.u32 %v44, 4294901760
    %v204 = vsub.f32 %v44, %v203
    %205 = vmatpush.msra.mxu0 %v204
    %v206 = vand.u32 %v43, 4294901760
    %v207 = vsub.f32 %v43, %v206
    %208 = vmatpush.msra.mxu0 %v207
    %v209 = vand.u32 %v42, 4294901760
    %v210 = vsub.f32 %v42, %v209
    %211 = vmatpush.msra.mxu0 %v210
    %v212 = vand.u32 %v41, 4294901760
    %v213 = vsub.f32 %v41, %v212
    %214 = vmatpush.msra.mxu0 %v213
    %v215 = vand.u32 %v40, 4294901760
    %v216 = vsub.f32 %v40, %v215
    %217 = vmatpush.msra.mxu0 %v216
    %v218 = vand.u32 %v39, 4294901760
    %v219 = vsub.f32 %v39, %v218
    %220 = vmatpush.msra.mxu0 %v219
    %v221 = vand.u32 %v38, 4294901760
    %v222 = vsub.f32 %v38, %v221
    %223 = vmatpush.msra.mxu0 %v222
    %v224 = vand.u32 %v37, 4294901760
    %v225 = vsub.f32 %v37, %v224
    %226 = vmatpush.msra.mxu0 %v225
    %v227 = vand.u32 %v36, 4294901760
    %v228 = vsub.f32 %v36, %v227
    %229 = vmatpush.msra.mxu0 %v228
    %v230 = vand.u32 %v35, 4294901760
    %v231 = vsub.f32 %v35, %v230
    %232 = vmatpush.msra.mxu0 %v231
    %v233 = vand.u32 %v34, 4294901760
    %v234 = vsub.f32 %v34, %v233
    %235 = vmatpush.msra.mxu0 %v234
    %v236 = vand.u32 %v33, 4294901760
    %v237 = vsub.f32 %v33, %v236
    %238 = vmatpush.msra.mxu0 %v237
    %v239 = vand.u32 %v32, 4294901760
    %v240 = vsub.f32 %v32, %v239
    %241 = vmatpush.msra.mxu0 %v240
    %v242 = vand.u32 %v31, 4294901760
    %v243 = vsub.f32 %v31, %v242
    %244 = vmatpush.msra.mxu0 %v243
    %v245 = vand.u32 %v30, 4294901760
    %v246 = vsub.f32 %v30, %v245
    %247 = vmatpush.msra.mxu0 %v246
    %v248 = vand.u32 %v29, 4294901760
    %v249 = vsub.f32 %v29, %v248
    %250 = vmatpush.msra.mxu0 %v249
    %v251 = vand.u32 %v27, 4294901760
    %v252 = vsub.f32 %v27, %v251
    %253 = vmatmul.f32.gmra.mxu0 %v252
    %v254 = vpop.f32.mrf.mxu0
    %v255 = vadd.f32 %v201, %v254
    %256 = vdwg.mxu0
    %v257 = vand.u32 %v44, 4294901760
    %258 = vmatpush.msra.mxu0 %v257
    %v259 = vand.u32 %v43, 4294901760
    %260 = vmatpush.msra.mxu0 %v259
    %v261 = vand.u32 %v42, 4294901760
    %262 = vmatpush.msra.mxu0 %v261
    %v263 = vand.u32 %v41, 4294901760
    %264 = vmatpush.msra.mxu0 %v263
    %v265 = vand.u32 %v40, 4294901760
    %266 = vmatpush.msra.mxu0 %v265
    %v267 = vand.u32 %v39, 4294901760
    %268 = vmatpush.msra.mxu0 %v267
    %v269 = vand.u32 %v38, 4294901760
    %270 = vmatpush.msra.mxu0 %v269
    %v271 = vand.u32 %v37, 4294901760
    %272 = vmatpush.msra.mxu0 %v271
    %v273 = vand.u32 %v36, 4294901760
    %274 = vmatpush.msra.mxu0 %v273
    %v275 = vand.u32 %v35, 4294901760
    %276 = vmatpush.msra.mxu0 %v275
    %v277 = vand.u32 %v34, 4294901760
    %278 = vmatpush.msra.mxu0 %v277
    %v279 = vand.u32 %v33, 4294901760
    %280 = vmatpush.msra.mxu0 %v279
    %v281 = vand.u32 %v32, 4294901760
    %282 = vmatpush.msra.mxu0 %v281
    %v283 = vand.u32 %v31, 4294901760
    %284 = vmatpush.msra.mxu0 %v283
    %v285 = vand.u32 %v30, 4294901760
    %286 = vmatpush.msra.mxu0 %v285
    %v287 = vand.u32 %v29, 4294901760
    %288 = vmatpush.msra.mxu0 %v287
    %v289 = vand.u32 %v27, 4294901760
    %v290 = vsub.f32 %v27, %v289
    %v291 = vand.u32 %v290, 4294901760
    %292 = vmatmul.f32.gmra.mxu0 %v291
    %v293 = vpop.f32.mrf.mxu0
    %v294 = vadd.f32 %v255, %v293
    %295 = vdwg.mxu0
    %v296 = vand.u32 %v44, 4294901760
    %v297 = vsub.f32 %v44, %v296
    %v298 = vand.u32 %v297, 4294901760
    %299 = vmatpush.msra.mxu0 %v298
    %v300 = vand.u32 %v43, 4294901760
    %v301 = vsub.f32 %v43, %v300
    %v302 = vand.u32 %v301, 4294901760
    %303 = vmatpush.msra.mxu0 %v302
    %v304 = vand.u32 %v42, 4294901760
    %v305 = vsub.f32 %v42, %v304
    %v306 = vand.u32 %v305, 4294901760
    %307 = vmatpush.msra.mxu0 %v306
    %v308 = vand.u32 %v41, 4294901760
    %v309 = vsub.f32 %v41, %v308
    %v310 = vand.u32 %v309, 4294901760
    %311 = vmatpush.msra.mxu0 %v310
    %v312 = vand.u32 %v40, 4294901760
    %v313 = vsub.f32 %v40, %v312
    %v314 = vand.u32 %v313, 4294901760
    %315 = vmatpush.msra.mxu0 %v314
    %v316 = vand.u32 %v39, 4294901760
    %v317 = vsub.f32 %v39, %v316
    %v318 = vand.u32 %v317, 4294901760
    %319 = vmatpush.msra.mxu0 %v318
    %v320 = vand.u32 %v38, 4294901760
    %v321 = vsub.f32 %v38, %v320
    %v322 = vand.u32 %v321, 4294901760
    %323 = vmatpush.msra.mxu0 %v322
    %v324 = vand.u32 %v37, 4294901760
    %v325 = vsub.f32 %v37, %v324
    %v326 = vand.u32 %v325, 4294901760
    %327 = vmatpush.msra.mxu0 %v326
    %v328 = vand.u32 %v36, 4294901760
    %v329 = vsub.f32 %v36, %v328
    %v330 = vand.u32 %v329, 4294901760
    %331 = vmatpush.msra.mxu0 %v330
    %v332 = vand.u32 %v35, 4294901760
    %v333 = vsub.f32 %v35, %v332
    %v334 = vand.u32 %v333, 4294901760
    %335 = vmatpush.msra.mxu0 %v334
    %v336 = vand.u32 %v34, 4294901760
    %v337 = vsub.f32 %v34, %v336
    %v338 = vand.u32 %v337, 4294901760
    %339 = vmatpush.msra.mxu0 %v338
    %v340 = vand.u32 %v33, 4294901760
    %v341 = vsub.f32 %v33, %v340
    %v342 = vand.u32 %v341, 4294901760
    %343 = vmatpush.msra.mxu0 %v342
    %v344 = vand.u32 %v32, 4294901760
    %v345 = vsub.f32 %v32, %v344
    %v346 = vand.u32 %v345, 4294901760
    %347 = vmatpush.msra.mxu0 %v346
    %v348 = vand.u32 %v31, 4294901760
    %v349 = vsub.f32 %v31, %v348
    %v350 = vand.u32 %v349, 4294901760
    %351 = vmatpush.msra.mxu0 %v350
    %v352 = vand.u32 %v30, 4294901760
    %v353 = vsub.f32 %v30, %v352
    %v354 = vand.u32 %v353, 4294901760
    %355 = vmatpush.msra.mxu0 %v354
    %v356 = vand.u32 %v29, 4294901760
    %v357 = vsub.f32 %v29, %v356
    %v358 = vand.u32 %v357, 4294901760
    %359 = vmatpush.msra.mxu0 %v358
    %v360 = vand.u32 %v27, 4294901760
    %361 = vmatmul.f32.gmra.mxu0 %v360
    %v362 = vpop.f32.mrf.mxu0
    %v363 = vadd.f32 %v294, %v362
    %364 = vdwg.mxu0
    %v365 = vand.u32 %v44, 4294901760
    %366 = vmatpush.msra.mxu0 %v365
    %v367 = vand.u32 %v43, 4294901760
    %368 = vmatpush.msra.mxu0 %v367
    %v369 = vand.u32 %v42, 4294901760
    %370 = vmatpush.msra.mxu0 %v369
    %v371 = vand.u32 %v41, 4294901760
    %372 = vmatpush.msra.mxu0 %v371
    %v373 = vand.u32 %v40, 4294901760
    %374 = vmatpush.msra.mxu0 %v373
    %v375 = vand.u32 %v39, 4294901760
    %376 = vmatpush.msra.mxu0 %v375
    %v377 = vand.u32 %v38, 4294901760
    %378 = vmatpush.msra.mxu0 %v377
    %v379 = vand.u32 %v37, 4294901760
    %380 = vmatpush.msra.mxu0 %v379
    %v381 = vand.u32 %v36, 4294901760
    %382 = vmatpush.msra.mxu0 %v381
    %v383 = vand.u32 %v35, 4294901760
    %384 = vmatpush.msra.mxu0 %v383
    %v385 = vand.u32 %v34, 4294901760
    %386 = vmatpush.msra.mxu0 %v385
    %v387 = vand.u32 %v33, 4294901760
    %388 = vmatpush.msra.mxu0 %v387
    %v389 = vand.u32 %v32, 4294901760
    %390 = vmatpush.msra.mxu0 %v389
    %v391 = vand.u32 %v31, 4294901760
    %392 = vmatpush.msra.mxu0 %v391
    %v393 = vand.u32 %v30, 4294901760
    %394 = vmatpush.msra.mxu0 %v393
    %v395 = vand.u32 %v29, 4294901760
    %396 = vmatpush.msra.mxu0 %v395
    %v397 = vand.u32 %v27, 4294901760
    %398 = vmatmul.f32.gmra.mxu0 %v397
    %v399 = vpop.f32.mrf.mxu0
    %v400 = vadd.f32 %v363, %v399
    %401 = vdwg.mxu0
    %v402 = vand.u32 %v60, 4294901760
    %403 = vmatpush.msra.mxu0 %v402
    %v404 = vand.u32 %v59, 4294901760
    %405 = vmatpush.msra.mxu0 %v404
    %v406 = vand.u32 %v58, 4294901760
    %407 = vmatpush.msra.mxu0 %v406
    %v408 = vand.u32 %v57, 4294901760
    %409 = vmatpush.msra.mxu0 %v408
    %v410 = vand.u32 %v56, 4294901760
    %411 = vmatpush.msra.mxu0 %v410
    %v412 = vand.u32 %v55, 4294901760
    %413 = vmatpush.msra.mxu0 %v412
    %v414 = vand.u32 %v54, 4294901760
    %415 = vmatpush.msra.mxu0 %v414
    %v416 = vand.u32 %v53, 4294901760
    %417 = vmatpush.msra.mxu0 %v416
    %v418 = vand.u32 %v52, 4294901760
    %419 = vmatpush.msra.mxu0 %v418
    %v420 = vand.u32 %v51, 4294901760
    %421 = vmatpush.msra.mxu0 %v420
    %v422 = vand.u32 %v50, 4294901760
    %423 = vmatpush.msra.mxu0 %v422
    %v424 = vand.u32 %v49, 4294901760
    %425 = vmatpush.msra.mxu0 %v424
    %v426 = vand.u32 %v48, 4294901760
    %427 = vmatpush.msra.mxu0 %v426
    %v428 = vand.u32 %v47, 4294901760
    %429 = vmatpush.msra.mxu0 %v428
    %v430 = vand.u32 %v46, 4294901760
    %431 = vmatpush.msra.mxu0 %v430
    %v432 = vand.u32 %v45, 4294901760
    %433 = vmatpush.msra.mxu0 %v432
    %v434 = vand.u32 %v28, 4294901760
    %v435 = vsub.f32 %v28, %v434
    %v436 = vand.u32 %v435, 4294901760
    %v437 = vsub.f32 %v435, %v436
    %v438 = vand.u32 %v437, 4294901760
    %439 = vmatmul.f32.gmra.mxu0 %v438
    %v440 = vpop.f32.mrf.mxu0
    %v441 = vadd.f32 %v400, %v440
    %442 = vdwg.mxu0
    %v443 = vand.u32 %v60, 4294901760
    %v444 = vsub.f32 %v60, %v443
    %v445 = vand.u32 %v444, 4294901760
    %v446 = vsub.f32 %v444, %v445
    %v447 = vand.u32 %v446, 4294901760
    %448 = vmatpush.msra.mxu0 %v447
    %v449 = vand.u32 %v59, 4294901760
    %v450 = vsub.f32 %v59, %v449
    %v451 = vand.u32 %v450, 4294901760
    %v452 = vsub.f32 %v450, %v451
    %v453 = vand.u32 %v452, 4294901760
    %454 = vmatpush.msra.mxu0 %v453
    %v455 = vand.u32 %v58, 4294901760
    %v456 = vsub.f32 %v58, %v455
    %v457 = vand.u32 %v456, 4294901760
    %v458 = vsub.f32 %v456, %v457
    %v459 = vand.u32 %v458, 4294901760
    %460 = vmatpush.msra.mxu0 %v459
    %v461 = vand.u32 %v57, 4294901760
    %v462 = vsub.f32 %v57, %v461
    %v463 = vand.u32 %v462, 4294901760
    %v464 = vsub.f32 %v462, %v463
    %v465 = vand.u32 %v464, 4294901760
    %466 = vmatpush.msra.mxu0 %v465
    %v467 = vand.u32 %v56, 4294901760
    %v468 = vsub.f32 %v56, %v467
    %v469 = vand.u32 %v468, 4294901760
    %v470 = vsub.f32 %v468, %v469
    %v471 = vand.u32 %v470, 4294901760
    %472 = vmatpush.msra.mxu0 %v471
    %v473 = vand.u32 %v55, 4294901760
    %v474 = vsub.f32 %v55, %v473
    %v475 = vand.u32 %v474, 4294901760
    %v476 = vsub.f32 %v474, %v475
    %v477 = vand.u32 %v476, 4294901760
    %478 = vmatpush.msra.mxu0 %v477
    %v479 = vand.u32 %v54, 4294901760
    %v480 = vsub.f32 %v54, %v479
    %v481 = vand.u32 %v480, 4294901760
    %v482 = vsub.f32 %v480, %v481
    %v483 = vand.u32 %v482, 4294901760
    %484 = vmatpush.msra.mxu0 %v483
    %v485 = vand.u32 %v53, 4294901760
    %v486 = vsub.f32 %v53, %v485
    %v487 = vand.u32 %v486, 4294901760
    %v488 = vsub.f32 %v486, %v487
    %v489 = vand.u32 %v488, 4294901760
    %490 = vmatpush.msra.mxu0 %v489
    %v491 = vand.u32 %v52, 4294901760
    %v492 = vsub.f32 %v52, %v491
    %v493 = vand.u32 %v492, 4294901760
    %v494 = vsub.f32 %v492, %v493
    %v495 = vand.u32 %v494, 4294901760
    %496 = vmatpush.msra.mxu0 %v495
    %v497 = vand.u32 %v51, 4294901760
    %v498 = vsub.f32 %v51, %v497
    %v499 = vand.u32 %v498, 4294901760
    %v500 = vsub.f32 %v498, %v499
    %v501 = vand.u32 %v500, 4294901760
    %502 = vmatpush.msra.mxu0 %v501
    %v503 = vand.u32 %v50, 4294901760
    %v504 = vsub.f32 %v50, %v503
    %v505 = vand.u32 %v504, 4294901760
    %v506 = vsub.f32 %v504, %v505
    %v507 = vand.u32 %v506, 4294901760
    %508 = vmatpush.msra.mxu0 %v507
    %v509 = vand.u32 %v49, 4294901760
    %v510 = vsub.f32 %v49, %v509
    %v511 = vand.u32 %v510, 4294901760
    %v512 = vsub.f32 %v510, %v511
    %v513 = vand.u32 %v512, 4294901760
    %514 = vmatpush.msra.mxu0 %v513
    %v515 = vand.u32 %v48, 4294901760
    %v516 = vsub.f32 %v48, %v515
    %v517 = vand.u32 %v516, 4294901760
    %v518 = vsub.f32 %v516, %v517
    %v519 = vand.u32 %v518, 4294901760
    %520 = vmatpush.msra.mxu0 %v519
    %v521 = vand.u32 %v47, 4294901760
    %v522 = vsub.f32 %v47, %v521
    %v523 = vand.u32 %v522, 4294901760
    %v524 = vsub.f32 %v522, %v523
    %v525 = vand.u32 %v524, 4294901760
    %526 = vmatpush.msra.mxu0 %v525
    %v527 = vand.u32 %v46, 4294901760
    %v528 = vsub.f32 %v46, %v527
    %v529 = vand.u32 %v528, 4294901760
    %v530 = vsub.f32 %v528, %v529
    %v531 = vand.u32 %v530, 4294901760
    %532 = vmatpush.msra.mxu0 %v531
    %v533 = vand.u32 %v45, 4294901760
    %v534 = vsub.f32 %v45, %v533
    %v535 = vand.u32 %v534, 4294901760
    %v536 = vsub.f32 %v534, %v535
    %v537 = vand.u32 %v536, 4294901760
    %538 = vmatpush.msra.mxu0 %v537
    %v539 = vand.u32 %v28, 4294901760
    %540 = vmatmul.f32.gmra.mxu0 %v539
    %v541 = vpop.f32.mrf.mxu0
    %v542 = vadd.f32 %v441, %v541
    %543 = vdwg.mxu0
    %v544 = vand.u32 %v60, 4294901760
    %v545 = vsub.f32 %v60, %v544
    %546 = vmatpush.msra.mxu0 %v545
    %v547 = vand.u32 %v59, 4294901760
    %v548 = vsub.f32 %v59, %v547
    %549 = vmatpush.msra.mxu0 %v548
    %v550 = vand.u32 %v58, 4294901760
    %v551 = vsub.f32 %v58, %v550
    %552 = vmatpush.msra.mxu0 %v551
    %v553 = vand.u32 %v57, 4294901760
    %v554 = vsub.f32 %v57, %v553
    %555 = vmatpush.msra.mxu0 %v554
    %v556 = vand.u32 %v56, 4294901760
    %v557 = vsub.f32 %v56, %v556
    %558 = vmatpush.msra.mxu0 %v557
    %v559 = vand.u32 %v55, 4294901760
    %v560 = vsub.f32 %v55, %v559
    %561 = vmatpush.msra.mxu0 %v560
    %v562 = vand.u32 %v54, 4294901760
    %v563 = vsub.f32 %v54, %v562
    %564 = vmatpush.msra.mxu0 %v563
    %v565 = vand.u32 %v53, 4294901760
    %v566 = vsub.f32 %v53, %v565
    %567 = vmatpush.msra.mxu0 %v566
    %v568 = vand.u32 %v52, 4294901760
    %v569 = vsub.f32 %v52, %v568
    %570 = vmatpush.msra.mxu0 %v569
    %v571 = vand.u32 %v51, 4294901760
    %v572 = vsub.f32 %v51, %v571
    %573 = vmatpush.msra.mxu0 %v572
    %v574 = vand.u32 %v50, 4294901760
    %v575 = vsub.f32 %v50, %v574
    %576 = vmatpush.msra.mxu0 %v575
    %v577 = vand.u32 %v49, 4294901760
    %v578 = vsub.f32 %v49, %v577
    %579 = vmatpush.msra.mxu0 %v578
    %v580 = vand.u32 %v48, 4294901760
    %v581 = vsub.f32 %v48, %v580
    %582 = vmatpush.msra.mxu0 %v581
    %v583 = vand.u32 %v47, 4294901760
    %v584 = vsub.f32 %v47, %v583
    %585 = vmatpush.msra.mxu0 %v584
    %v586 = vand.u32 %v46, 4294901760
    %v587 = vsub.f32 %v46, %v586
    %588 = vmatpush.msra.mxu0 %v587
    %v589 = vand.u32 %v45, 4294901760
    %v590 = vsub.f32 %v45, %v589
    %591 = vmatpush.msra.mxu0 %v590
    %v592 = vand.u32 %v28, 4294901760
    %v593 = vsub.f32 %v28, %v592
    %594 = vmatmul.f32.gmra.mxu0 %v593
    %v595 = vpop.f32.mrf.mxu0
    %v596 = vadd.f32 %v542, %v595
    %597 = vdwg.mxu0
    %v598 = vand.u32 %v60, 4294901760
    %599 = vmatpush.msra.mxu0 %v598
    %v600 = vand.u32 %v59, 4294901760
    %601 = vmatpush.msra.mxu0 %v600
    %v602 = vand.u32 %v58, 4294901760
    %603 = vmatpush.msra.mxu0 %v602
    %v604 = vand.u32 %v57, 4294901760
    %605 = vmatpush.msra.mxu0 %v604
    %v606 = vand.u32 %v56, 4294901760
    %607 = vmatpush.msra.mxu0 %v606
    %v608 = vand.u32 %v55, 4294901760
    %609 = vmatpush.msra.mxu0 %v608
    %v610 = vand.u32 %v54, 4294901760
    %611 = vmatpush.msra.mxu0 %v610
    %v612 = vand.u32 %v53, 4294901760
    %613 = vmatpush.msra.mxu0 %v612
    %v614 = vand.u32 %v52, 4294901760
    %615 = vmatpush.msra.mxu0 %v614
    %v616 = vand.u32 %v51, 4294901760
    %617 = vmatpush.msra.mxu0 %v616
    %v618 = vand.u32 %v50, 4294901760
    %619 = vmatpush.msra.mxu0 %v618
    %v620 = vand.u32 %v49, 4294901760
    %621 = vmatpush.msra.mxu0 %v620
    %v622 = vand.u32 %v48, 4294901760
    %623 = vmatpush.msra.mxu0 %v622
    %v624 = vand.u32 %v47, 4294901760
    %625 = vmatpush.msra.mxu0 %v624
    %v626 = vand.u32 %v46, 4294901760
    %627 = vmatpush.msra.mxu0 %v626
    %v628 = vand.u32 %v45, 4294901760
    %629 = vmatpush.msra.mxu0 %v628
    %v630 = vand.u32 %v28, 4294901760
    %v631 = vsub.f32 %v28, %v630
    %v632 = vand.u32 %v631, 4294901760
    %633 = vmatmul.f32.gmra.mxu0 %v632
    %v634 = vpop.f32.mrf.mxu0
    %v635 = vadd.f32 %v596, %v634
    %636 = vdwg.mxu0
    %v637 = vand.u32 %v60, 4294901760
    %v638 = vsub.f32 %v60, %v637
    %v639 = vand.u32 %v638, 4294901760
    %640 = vmatpush.msra.mxu0 %v639
    %v641 = vand.u32 %v59, 4294901760
    %v642 = vsub.f32 %v59, %v641
    %v643 = vand.u32 %v642, 4294901760
    %644 = vmatpush.msra.mxu0 %v643
    %v645 = vand.u32 %v58, 4294901760
    %v646 = vsub.f32 %v58, %v645
    %v647 = vand.u32 %v646, 4294901760
    %648 = vmatpush.msra.mxu0 %v647
    %v649 = vand.u32 %v57, 4294901760
    %v650 = vsub.f32 %v57, %v649
    %v651 = vand.u32 %v650, 4294901760
    %652 = vmatpush.msra.mxu0 %v651
    %v653 = vand.u32 %v56, 4294901760
    %v654 = vsub.f32 %v56, %v653
    %v655 = vand.u32 %v654, 4294901760
    %656 = vmatpush.msra.mxu0 %v655
    %v657 = vand.u32 %v55, 4294901760
    %v658 = vsub.f32 %v55, %v657
    %v659 = vand.u32 %v658, 4294901760
    %660 = vmatpush.msra.mxu0 %v659
    %v661 = vand.u32 %v54, 4294901760
    %v662 = vsub.f32 %v54, %v661
    %v663 = vand.u32 %v662, 4294901760
    %664 = vmatpush.msra.mxu0 %v663
    %v665 = vand.u32 %v53, 4294901760
    %v666 = vsub.f32 %v53, %v665
    %v667 = vand.u32 %v666, 4294901760
    %668 = vmatpush.msra.mxu0 %v667
    %v669 = vand.u32 %v52, 4294901760
    %v670 = vsub.f32 %v52, %v669
    %v671 = vand.u32 %v670, 4294901760
    %672 = vmatpush.msra.mxu0 %v671
    %v673 = vand.u32 %v51, 4294901760
    %v674 = vsub.f32 %v51, %v673
    %v675 = vand.u32 %v674, 4294901760
    %676 = vmatpush.msra.mxu0 %v675
    %v677 = vand.u32 %v50, 4294901760
    %v678 = vsub.f32 %v50, %v677
    %v679 = vand.u32 %v678, 4294901760
    %680 = vmatpush.msra.mxu0 %v679
    %v681 = vand.u32 %v49, 4294901760
    %v682 = vsub.f32 %v49, %v681
    %v683 = vand.u32 %v682, 4294901760
    %684 = vmatpush.msra.mxu0 %v683
    %v685 = vand.u32 %v48, 4294901760
    %v686 = vsub.f32 %v48, %v685
    %v687 = vand.u32 %v686, 4294901760
    %688 = vmatpush.msra.mxu0 %v687
    %v689 = vand.u32 %v47, 4294901760
    %v690 = vsub.f32 %v47, %v689
    %v691 = vand.u32 %v690, 4294901760
    %692 = vmatpush.msra.mxu0 %v691
    %v693 = vand.u32 %v46, 4294901760
    %v694 = vsub.f32 %v46, %v693
    %v695 = vand.u32 %v694, 4294901760
    %696 = vmatpush.msra.mxu0 %v695
    %v697 = vand.u32 %v45, 4294901760
    %v698 = vsub.f32 %v45, %v697
    %v699 = vand.u32 %v698, 4294901760
    %700 = vmatpush.msra.mxu0 %v699
    %v701 = vand.u32 %v28, 4294901760
    %702 = vmatmul.f32.gmra.mxu0 %v701
    %v703 = vpop.f32.mrf.mxu0
    %v704 = vadd.f32 %v635, %v703
    %705 = vdwg.mxu0
    %v706 = vand.u32 %v60, 4294901760
    %707 = vmatpush.msra.mxu0 %v706
    %v708 = vand.u32 %v59, 4294901760
    %709 = vmatpush.msra.mxu0 %v708
    %v710 = vand.u32 %v58, 4294901760
    %711 = vmatpush.msra.mxu0 %v710
    %v712 = vand.u32 %v57, 4294901760
    %713 = vmatpush.msra.mxu0 %v712
    %v714 = vand.u32 %v56, 4294901760
    %715 = vmatpush.msra.mxu0 %v714
    %v716 = vand.u32 %v55, 4294901760
    %717 = vmatpush.msra.mxu0 %v716
    %v718 = vand.u32 %v54, 4294901760
    %719 = vmatpush.msra.mxu0 %v718
    %v720 = vand.u32 %v53, 4294901760
    %721 = vmatpush.msra.mxu0 %v720
    %v722 = vand.u32 %v52, 4294901760
    %723 = vmatpush.msra.mxu0 %v722
    %v724 = vand.u32 %v51, 4294901760
    %725 = vmatpush.msra.mxu0 %v724
    %v726 = vand.u32 %v50, 4294901760
    %727 = vmatpush.msra.mxu0 %v726
    %v728 = vand.u32 %v49, 4294901760
    %729 = vmatpush.msra.mxu0 %v728
    %v730 = vand.u32 %v48, 4294901760
    %731 = vmatpush.msra.mxu0 %v730
    %v732 = vand.u32 %v47, 4294901760
    %733 = vmatpush.msra.mxu0 %v732
    %v734 = vand.u32 %v46, 4294901760
    %735 = vmatpush.msra.mxu0 %v734
    %v736 = vand.u32 %v45, 4294901760
    %737 = vmatpush.msra.mxu0 %v736
    %v738 = vand.u32 %v28, 4294901760
    %739 = vmatmul.f32.gmra.mxu0 %v738
    %v740 = vpop.f32.mrf.mxu0
    %v741 = vadd.f32 %v704, %v740
    %742 = vdwg.mxu0
    %vm743 = vcmask 113664
    %744 = vst.msk [vmem:[%s2] sm:$0xff] %vm743, %v741
    // Predicated region
    $region14: #{spatial_pyramid_pooling_2d.1} parent=1 // pred_check
      _
    $region15: #{spatial_pyramid_pooling_2d.1} parent=1 // pred_check_branch
      %746 = sbr.rel (0) target = $region17
    $region16: #{spatial_pyramid_pooling_2d.1} parent=1 // pred_region
      _
    $region17: #{spatial_pyramid_pooling_2d.1} parent=1 // pred_fallthru
      _
    // Predicated region
    $region18: #{spatial_pyramid_pooling_2d.1} parent=1 // pred_check
      _
    $region19: #{spatial_pyramid_pooling_2d.1} parent=1 // pred_check_branch
      %748 = sbr.rel (0) target = $region21
    $region20: #{spatial_pyramid_pooling_2d.1} parent=1 // pred_region
      _
    $region21: #{spatial_pyramid_pooling_2d.1} parent=1 // pred_fallthru
      _
    %749 = vsyncpa [#allocation3], 1

</llo_original>
